<compile_context>
chip_gen: v6e
topology: v6e:2x2x1
jax: 0.10.0
libtpu: 0.0.40
codegen_flags: <defaults>
</compile_context>

<pallas_src>
import functools

import jax
import jax.numpy as jnp
from jax import lax
from jax.experimental import pallas as pl
from jax.experimental.pallas import tpu as pltpu

LANES = 128           # vreg lane width
SUBLANES = 8          # f32 vreg sublane count
MAX_TILE_ROWS = 2048  # rows (of 128 lanes) per grid step


def _mse_var_kernel(mean_ref, var_ref, label_ref, out_ref, *,
                    var_weight, tile_rows, valid_rows, need_mask):
    """Accumulate sum(exp(-w*var) * (mean-label)^2 + w*var) into an (8,128) slab.

    The 0.5 factor and the division by N (".mean()") are applied to the final
    scalar in the wrapper.
    """
    i = pl.program_id(0)

    @pl.when(i == 0)
    def _init():
        out_ref[...] = jnp.zeros_like(out_ref)

    m = mean_ref[...].astype(jnp.float32)
    v = var_ref[...].astype(jnp.float32) * jnp.float32(var_weight)
    d = m - label_ref[...].astype(jnp.float32)

    contrib = jnp.exp(-v) * (d * d) + v            # EUP exp + VPU mul/add

    if need_mask:
        # Tail tile: rows past `valid_rows` hold unspecified data; zero them.
        row = i * tile_rows + lax.broadcasted_iota(jnp.int32, contrib.shape, 0)
        contrib = jnp.where(row < valid_rows, contrib, 0.0)

    # Vreg-shaped partial sums (pure VPU adds); one final XLU reduce happens
    # on the (8,128) result in the wrapper.
    out_ref[...] += contrib.reshape(-1, SUBLANES, LANES).sum(axis=0)


def mse_var_loss(mean, var, label, var_weight, *, max_tile_rows=MAX_TILE_ROWS):
    assert mean.shape == var.shape == label.shape
    n = mean.size

    flat_m = mean.reshape(-1)
    flat_v = var.reshape(-1)
    flat_l = label.reshape(-1)

    # Lane-dense (rows, 128) slab with rows a multiple of 8.  A single pad is
    # emitted only when the element count is not already aligned; zero-padded
    # entries contribute exp(0)*0 + 0 = 0 to the accumulated sum.
    chunk = SUBLANES * LANES
    aligned = pl.cdiv(n, chunk) * chunk
    if aligned != n:
        pad = aligned - n
        flat_m = jnp.pad(flat_m, (0, pad))
        flat_v = jnp.pad(flat_v, (0, pad))
        flat_l = jnp.pad(flat_l, (0, pad))

    rows = aligned // LANES                       # multiple of 8
    tile_rows = min(int(max_tile_rows), rows)
    tile_rows = max(SUBLANES, tile_rows - (tile_rows % SUBLANES))
    grid_steps = pl.cdiv(rows, tile_rows)
    need_mask = (grid_steps * tile_rows != rows)  # partial last block

    m2 = flat_m.reshape(rows, LANES)
    v2 = flat_v.reshape(rows, LANES)
    l2 = flat_l.reshape(rows, LANES)

    tile_spec = pl.BlockSpec((tile_rows, LANES), lambda i: (i, 0))

    kernel = functools.partial(
        _mse_var_kernel,
        var_weight=float(var_weight),
        tile_rows=tile_rows,
        valid_rows=rows,
        need_mask=need_mask,
    )

    partial_sums = pl.pallas_call(
        kernel,
        out_shape=jax.ShapeDtypeStruct((SUBLANES, LANES), jnp.float32),
        grid_spec=pltpu.PrefetchScalarGridSpec(
            num_scalar_prefetch=0,
            grid=(grid_steps,),
            in_specs=[tile_spec, tile_spec, tile_spec],
            out_specs=pl.BlockSpec((SUBLANES, LANES), lambda i: (0, 0)),
        ),
        compiler_params=pltpu.CompilerParams(
            dimension_semantics=("arbitrary",)),
    )(m2, v2, l2)

    # Final scalar: 0.5 hoisted out of the kernel; ".mean()" divide here.
    return 0.5 * jnp.sum(partial_sums) / jnp.float32(n)


def _reference(mean, var, label, var_weight):
    v = var_weight * var
    loss1 = jnp.exp(-v) * (mean - label) ** 2
    loss = 0.5 * (loss1 + v)
    return jnp.mean(loss)


if __name__ == "__main__":
    key = jax.random.PRNGKey(0)
    k1, k2, k3 = jax.random.split(key, 3)

    # Small NCHW shapes consistent with the module's forward.
    shape = (2, 4, 16, 16)
    mean = jax.random.normal(k1, shape, dtype=jnp.float32)
    var = jax.random.normal(k2, shape, dtype=jnp.float32)
    label = jax.random.normal(k3, shape, dtype=jnp.float32)
    var_weight = 0.5  # deterministic module "parameter"

    out = jax.block_until_ready(mse_var_loss(mean, var, label, var_weight))
    ref = _reference(mean, var, label, var_weight)
    assert jnp.allclose(out, ref, rtol=1e-5, atol=1e-5), (out, ref)

    # Also exercise (a) the multi-step grid + in-kernel tail mask and
    # (b) the single-pad path, on small deliberately awkward shapes.
    for shp, mtr in (((2, 4, 32, 32), 24), ((3, 5, 7, 11), MAX_TILE_ROWS)):
        a, b, c = (jax.random.normal(k, shp, dtype=jnp.float32)
                   for k in jax.random.split(jax.random.PRNGKey(1), 3))
        got = jax.block_until_ready(mse_var_loss(a, b, c, 1.3, max_tile_rows=mtr))
        want = _reference(a, b, c, 1.3)
        assert jnp.allclose(got, want, rtol=1e-5, atol=1e-5), (shp, got, want)

    print("KERNEL_OK")
</pallas_src>

<mosaic_0001>
module attributes {stable_mosaic.version = 11 : i64} {
  func.func @_mse_var_kernel(%arg0: i32, %arg1: memref<16x128xf32, #tpu.memory_space<vmem>>, %arg2: memref<16x128xf32, #tpu.memory_space<vmem>>, %arg3: memref<16x128xf32, #tpu.memory_space<vmem>>, %arg4: memref<8x128xf32, #tpu.memory_space<vmem>>) attributes {dimension_semantics = [#tpu.dimension_semantics<arbitrary>], iteration_bounds = array<i64: 1>, scalar_prefetch = 0 : i64, scratch_operands = 0 : i64, tpu.core_type = #tpu.core_type<tc>, window_params = [{transform_indices = @transform_0, window_bounds = array<i64: 16, 128>}, {transform_indices = @transform_1, window_bounds = array<i64: 16, 128>}, {transform_indices = @transform_2, window_bounds = array<i64: 16, 128>}, {pipeline_mode = #tpu.pipeline_mode<synchronous>, transform_indices = @transform_3, window_bounds = array<i64: 8, 128>}]} {
    %c0_i32 = arith.constant 0 : i32
    %0 = arith.cmpi eq, %arg0, %c0_i32 : i32
    %1 = arith.extui %0 : i1 to i32
    %c0_i32_0 = arith.constant 0 : i32
    %2 = arith.cmpi ne, %1, %c0_i32_0 : i32
    scf.if %2 {
      %cst_12 = arith.constant 0.000000e+00 : f32
      %20 = vector.broadcast %cst_12 : f32 to vector<8x128xf32>
      %c0_13 = arith.constant 0 : index
      %c0_14 = arith.constant 0 : index
      %21 = vector.load %arg4[%c0_13, %c0_14] : memref<8x128xf32, #tpu.memory_space<vmem>>, vector<8x128xf32>
      tpu.vector_store %arg4[%c0_13, %c0_14], %20 {strides = array<i32>} : memref<8x128xf32, #tpu.memory_space<vmem>>, vector<8x128xf32>,
    } else {
    }
    %c0 = arith.constant 0 : index
    %c0_1 = arith.constant 0 : index
    %3 = vector.load %arg1[%c0, %c0_1] : memref<16x128xf32, #tpu.memory_space<vmem>>, vector<16x128xf32>
    %c0_2 = arith.constant 0 : index
    %c0_3 = arith.constant 0 : index
    %4 = vector.load %arg2[%c0_2, %c0_3] : memref<16x128xf32, #tpu.memory_space<vmem>>, vector<16x128xf32>
    %cst = arith.constant 5.000000e-01 : f32
    %5 = vector.broadcast %cst : f32 to vector<16x128xf32>
    %6 = arith.mulf %4, %5 : vector<16x128xf32>
    %c0_4 = arith.constant 0 : index
    %c0_5 = arith.constant 0 : index
    %7 = vector.load %arg3[%c0_4, %c0_5] : memref<16x128xf32, #tpu.memory_space<vmem>>, vector<16x128xf32>
    %8 = arith.subf %3, %7 : vector<16x128xf32>
    %cst_6 = arith.constant 0.000000e+00 : f32
    %9 = vector.broadcast %cst_6 : f32 to vector<16x128xf32>
    %10 = arith.subf %9, %6 : vector<16x128xf32>
    %11 = math.exp %10 : vector<16x128xf32>
    %12 = arith.mulf %8, %8 : vector<16x128xf32>
    %13 = arith.mulf %11, %12 : vector<16x128xf32>
    %14 = arith.addf %13, %6 : vector<16x128xf32>
    %c0_7 = arith.constant 0 : index
    %c0_8 = arith.constant 0 : index
    %15 = vector.load %arg4[%c0_7, %c0_8] : memref<8x128xf32, #tpu.memory_space<vmem>>, vector<8x128xf32>
    %16 = vector.shape_cast %14 : vector<16x128xf32> to vector<2x8x128xf32>
    %cst_9 = arith.constant dense<0.000000e+00> : vector<8x128xf32>
    %17 = vector.multi_reduction <add>, %16, %cst_9 [0] : vector<2x8x128xf32> to vector<8x128xf32>
    %18 = arith.addf %15, %17 : vector<8x128xf32>
    %c0_10 = arith.constant 0 : index
    %c0_11 = arith.constant 0 : index
    %19 = vector.load %arg4[%c0_10, %c0_11] : memref<8x128xf32, #tpu.memory_space<vmem>>, vector<8x128xf32>
    tpu.vector_store %arg4[%c0_10, %c0_11], %18 {strides = array<i32>} : memref<8x128xf32, #tpu.memory_space<vmem>>, vector<8x128xf32>,
    return
  }
  func.func @transform_0(%arg0: i32) -> (i32, i32) {
    %c0_i32 = arith.constant 0 : i32
    %c0_i32_0 = arith.constant 0 : i32
    return %arg0, %c0_i32 : i32, i32
  }
  func.func @transform_1(%arg0: i32) -> (i32, i32) {
    %c0_i32 = arith.constant 0 : i32
    %c0_i32_0 = arith.constant 0 : i32
    return %arg0, %c0_i32 : i32, i32
  }
  func.func @transform_2(%arg0: i32) -> (i32, i32) {
    %c0_i32 = arith.constant 0 : i32
    %c0_i32_0 = arith.constant 0 : i32
    return %arg0, %c0_i32 : i32, i32
  }
  func.func @transform_3(%arg0: i32) -> (i32, i32) {
    %c0_i32 = arith.constant 0 : i32
    %c0_i32_0 = arith.constant 0 : i32
    %c0_i32_1 = arith.constant 0 : i32
    return %c0_i32, %c0_i32_0 : i32, i32
  }
}

</mosaic_0001>

<llo_original>
// kernel: tpu_custom_call.1
$region0: #{tpu_custom_call.1}
  #allocation0 [shape = 'u32[]', space=smem, size = 0x4, offset = 0x4, fixed_abs, tag = 'smem constant byte address 0x4 - core index']
  #allocation1 [shape = 'u32[144,128]{1,0:T(1,128)}', space=vmem, size = 0x12000, scoped, tag = 'internal scratch']
  %s0 = inlined_call_operand.hbm [shape: f32[16,128], index: 0, kind: input, shape index: {}]
  %s1 = inlined_call_operand.hbm [shape: f32[16,128], index: 1, kind: input, shape index: {}]
  %s2 = inlined_call_operand.hbm [shape: f32[16,128], index: 2, kind: input, shape index: {}]
  %s3 = inlined_call_operand.hbm [shape: f32[8,128], index: 3, kind: output, shape index: {}]
  %s4 = sld [smem:[#allocation0]]
  $region38: #{tpu_custom_call.1} parent=0
    _
  %s6 = ssub.s32 1, %s4
  %s7 = scalar_select 0, %s6, %s4
  $region1: #{tpu_custom_call.1} parent=0
    #allocation2 [shape = 'u8[8192]{0}', space=vmem, size = 0x2000, scoped, tag = 'input window, operand 0, single buffered']
    #allocation3 [shape = 's32[1]{0}', space=sflag, size = 0x4, scoped, tag = 'scoped memory for tpu_custom_call.1']
    #allocation4 [shape = 's32[1]{0}', space=sflag, size = 0x4, scoped, tag = 'scoped memory for tpu_custom_call.1']
    #allocation5 [shape = 'u8[8192]{0}', space=vmem, size = 0x2000, scoped, tag = 'input window, operand 1, single buffered']
    #allocation6 [shape = 's32[1]{0}', space=sflag, size = 0x4, scoped, tag = 'scoped memory for tpu_custom_call.1']
    #allocation7 [shape = 'u8[8192]{0}', space=vmem, size = 0x2000, scoped, tag = 'input window, operand 2, single buffered']
    #allocation8 [shape = 'u8[4096]{0}', space=vmem, size = 0x1000, scoped, tag = 'output window, operand 0, single buffered']
    %8 = vsyncpa [#allocation3], 0
    %9 = vsyncpa [#allocation6], 0
    %10 = vsyncpa [#allocation4], 0
    // Predicated region
    $region2: #{tpu_custom_call.1} parent=1 // pred_check
      _
    $region3: #{tpu_custom_call.1} parent=1 // pred_check_branch
      %12 = sbr.rel (0) target = $region5
    $region4: #{tpu_custom_call.1} parent=1 // pred_region
      %s14 = ssub.s32 256, 256
      %15 = vsyncadd [#allocation3], %s14
      %s16 = sshll.u32 [#allocation2], 4
      %s17 = int_to_ptr.vmem [resolvable:$true] %s16
      %22 = dma.hbm_to_vmem [thread:$0]  %s0, 256, %s17, [#allocation3], 128, 128, 8
    $region5: #{tpu_custom_call.1} parent=1 // pred_fallthru
      _
    // Predicated region
    $region6: #{tpu_custom_call.1} parent=1 // pred_check
      _
    $region7: #{tpu_custom_call.1} parent=1 // pred_check_branch
      %24 = sbr.rel (0) target = $region9
    $region8: #{tpu_custom_call.1} parent=1 // pred_region
      %s26 = ssub.s32 256, 256
      %27 = vsyncadd [#allocation6], %s26
      %s28 = sshll.u32 [#allocation5], 4
      %s29 = int_to_ptr.vmem [resolvable:$true] %s28
      %34 = dma.hbm_to_vmem [thread:$0]  %s1, 256, %s29, [#allocation6], 128, 128, 8
    $region9: #{tpu_custom_call.1} parent=1 // pred_fallthru
      _
    // Predicated region
    $region10: #{tpu_custom_call.1} parent=1 // pred_check
      _
    $region11: #{tpu_custom_call.1} parent=1 // pred_check_branch
      %36 = sbr.rel (0) target = $region13
    $region12: #{tpu_custom_call.1} parent=1 // pred_region
      %s38 = ssub.s32 256, 256
      %39 = vsyncadd [#allocation6], %s38
      %s40 = sshll.u32 [#allocation7], 4
      %s41 = int_to_ptr.vmem [resolvable:$true] %s40
      %46 = dma.hbm_to_vmem [thread:$0]  %s2, 256, %s41, [#allocation6], 128, 128, 8
    $region13: #{tpu_custom_call.1} parent=1 // pred_fallthru
      _
    // Predicated region
    $region14: #{tpu_custom_call.1} parent=1 // pred_check
      _
    $region15: #{tpu_custom_call.1} parent=1 // pred_check_branch
      %48 = sbr.rel (0) target = $region17
    $region16: #{tpu_custom_call.1} parent=1 // pred_region
      %49 = dma.done [#allocation3], 256
    $region17: #{tpu_custom_call.1} parent=1 // pred_fallthru
      _
    // Predicated region
    $region18: #{tpu_custom_call.1} parent=1 // pred_check
      _
    $region19: #{tpu_custom_call.1} parent=1 // pred_check_branch
      %51 = sbr.rel (0) target = $region21
    $region20: #{tpu_custom_call.1} parent=1 // pred_region
      %52 = dma.done [#allocation6], 256
    $region21: #{tpu_custom_call.1} parent=1 // pred_fallthru
      _
    // Predicated region
    $region22: #{tpu_custom_call.1} parent=1 // pred_check
      _
    $region23: #{tpu_custom_call.1} parent=1 // pred_check_branch
      %54 = sbr.rel (0) target = $region25
    $region24: #{tpu_custom_call.1} parent=1 // pred_region
      %55 = dma.done [#allocation6], 256
    $region25: #{tpu_custom_call.1} parent=1 // pred_fallthru
      _
    %p56 = scmp.eq.s32.totalorder 0, 0
    // Predicated region
    $region26: #{tpu_custom_call.1} parent=1 // pred_check
      %p57 = pneg %p56
    $region27: #{tpu_custom_call.1} parent=1 // pred_check_branch
      %59 = sbr.rel (%p57) target = $region29
    $region28: #{tpu_custom_call.1} parent=1 // pred_region
      %60 = vst [vmem:[#allocation8] sm:$0xff] 0.0
    $region29: #{tpu_custom_call.1} parent=1 // pred_fallthru
      _
    %v61 = vld [vmem:[#allocation2] sm:$0xff]
    %v62 = vld [vmem:[#allocation2 + $0x8] sm:$0xff]
    %v63 = vld [vmem:[#allocation5] sm:$0xff]
    %v64 = vld [vmem:[#allocation5 + $0x8] sm:$0xff]
    %v65 = vmul.f32 %v63, 0.5
    %v66 = vmul.f32 %v64, 0.5
    %v67 = vld [vmem:[#allocation7] sm:$0xff]
    %v68 = vld [vmem:[#allocation7 + $0x8] sm:$0xff]
    %v69 = vsub.f32 %v61, %v67
    %v70 = vsub.f32 %v62, %v68
    %v71 = vsub.f32 0.0, %v65
    %v72 = vsub.f32 0.0, %v66
    %v73 = vmul.f32 %v71, 1.442695
    %v74 = vpow.pop %v73
    %v75 = vmul.f32 %v72, 1.442695
    %v76 = vpow.pop %v75
    %v77 = vmul.f32 %v69, %v69
    %v78 = vmul.f32 %v70, %v70
    %v79 = vmul.f32 %v74, %v77
    %v80 = vmul.f32 %v76, %v78
    %v81 = vadd.f32 %v79, %v65
    %v82 = vadd.f32 %v80, %v66
    %v83 = vld [vmem:[#allocation8] sm:$0xff]
    %v84 = vadd.f32 %v81, %v82
    %v85 = vadd.f32 %v83, %v84
    %86 = vst [vmem:[#allocation8] sm:$0xff] %v85
    // Predicated region
    $region30: #{tpu_custom_call.1} parent=1 // pred_check
      _
    $region31: #{tpu_custom_call.1} parent=1 // pred_check_branch
      %88 = sbr.rel (0) target = $region33
    $region32: #{tpu_custom_call.1} parent=1 // pred_region
      %s90 = ssub.s32 128, 128
      %91 = vsyncadd [#allocation4], %s90
      %s93 = sshll.u32 [#allocation8], 4
      %s94 = int_to_ptr.vmem [resolvable:$true] %s93
      %96 = dma.vmem_to_hbm [thread:$0]  %s94, 128, %s3, [#allocation4]
    $region33: #{tpu_custom_call.1} parent=1 // pred_fallthru
      _
    // Predicated region
    $region34: #{tpu_custom_call.1} parent=1 // pred_check
      _
    $region35: #{tpu_custom_call.1} parent=1 // pred_check_branch
      %98 = sbr.rel (0) target = $region37
    $region36: #{tpu_custom_call.1} parent=1 // pred_region
      %99 = dma.done [#allocation4], 128
    $region37: #{tpu_custom_call.1} parent=1 // pred_fallthru
      _
    %100 = vsyncpa [#allocation3], 1
    %101 = vsyncpa [#allocation6], 1
    %102 = vsyncpa [#allocation4], 1

</llo_original>
